<compile_context>
chip_gen: v5e
topology: v5e:2x2
jax: 0.10.0
libtpu: 0.0.40
codegen_flags: <defaults>
</compile_context>

<pallas_src>
import functools

import jax
import jax.numpy as jnp
from jax import lax
from jax.experimental import pallas as pl
from jax.experimental.pallas import tpu as pltpu

_MIB = 1024 * 1024


def _round_up(v: int, m: int) -> int:
    return (v + m - 1) // m * m


def _down_conv_kernel(pairs_ref, bnd_ref, w01_ref, w2_ref, b_ref, out_ref,
                      acc_ref):
    """One (tm, tn) output tile of the strided conv.

    pairs_ref: (tm, 2*Cp)   row t = [x_pad[2t] ; x_pad[2t+1]]
    bnd_ref:   (1, 16, Cp)  row 0 = pairs[(i+1)*tm][:Cp]  (next tile's 1st row)
    w01_ref:   (2*Cp, tn)   folded conv taps k=0,1
    w2_ref:    (Cp, tn)     folded conv tap k=2
    b_ref:     (1, tn)      bias (f32)
    out_ref:   (tm, tn)
    acc_ref:   (tm, tn)     f32 scratch accumulator
    """
    cp = pairs_ref.shape[1] // 2
    p = pairs_ref[...]
    # k=2 tap derived on-chip: eshift[t] = x_pad[2t+2] = pairs[t+1][:Cp]; the
    # last row of the tile comes from the boundary input (no eshift HBM array).
    bnd_row = bnd_ref[...][0, 0:1, :]                       # (1, Cp)
    nxt = jnp.concatenate([p[1:, :cp], bnd_row], axis=0)    # (tm, Cp)
    acc_ref[...] = jnp.dot(p, w01_ref[...], preferred_element_type=jnp.float32)
    acc_ref[...] += jnp.dot(nxt, w2_ref[...], preferred_element_type=jnp.float32)
    out_ref[...] = (acc_ref[...] + b_ref[...]).astype(out_ref.dtype)


def _vmem_usage(tm, tn, cp, in_bytes, out_bytes):
    return (2 * tm * 2 * cp * in_bytes      # pairs        (double-buffered)
            + 2 * 16 * cp * in_bytes        # boundary rows
            + 2 * 3 * cp * tn * in_bytes    # w01 + w2     (double-buffered)
            + 2 * cp * 4                    # bias
            + 2 * tm * tn * out_bytes       # output tile  (double-buffered)
            + tm * tn * 4)                  # f32 accumulator scratch


def _choose_tiles(m_valid, cp, in_bytes, out_bytes, tile_m):
    # Generation-aware VMEM budget (v7x has 64 MiB physical vs 128 on v5e/v6e).
    try:
        cap = int(pltpu.get_tpu_info().vmem_capacity_bytes)
    except Exception:  # pragma: no cover - conservative v7x fallback
        cap = 64 * _MIB
    cap = max(cap, 64 * _MIB)
    budget = min(cap // 2, 48 * _MIB) - 4 * _MIB

    # Channel-tiling fallback when resident weights would not fit the budget.
    tn = cp
    if cp > 128 and _vmem_usage(16, tn, cp, in_bytes, out_bytes) > budget:
        tn = 128

    tm = max(16, _round_up(min(max(tile_m, 16), max(m_valid, 16)), 16))
    while tm > 16 and _vmem_usage(tm, tn, cp, in_bytes, out_bytes) > budget:
        tm = max(16, (tm // 2) // 16 * 16)

    usage = _vmem_usage(tm, tn, cp, in_bytes, out_bytes)
    vmem_limit = int(min(cap - 8 * _MIB, max(32 * _MIB, usage + 16 * _MIB)))
    return tm, tn, vmem_limit


@functools.partial(jax.jit, static_argnames=("compute_dtype", "tile_m"))
def downsample1d_nlc(x_nlc, weight, bias, *, compute_dtype=None, tile_m=1024):
    """Conv1d(C, C, 3, stride=2, padding=1) on NLC-layout input.

    x_nlc: (N, L, C); weight: (C, C, 3) PyTorch (out_ch, in_ch, k); bias: (C,)
    returns (N, L_out, C), L_out = floor((L + 2 - 3)/2) + 1.
    """
    N, L, C = x_nlc.shape
    L_out = (L - 1) // 2 + 1
    cdt = compute_dtype or x_nlc.dtype
    out_dtype = x_nlc.dtype

    Cp = max(128, _round_up(C, 128))
    in_bytes = jnp.dtype(cdt).itemsize
    out_bytes = jnp.dtype(out_dtype).itemsize

    # Per-batch padded rows (>= L_out+1 so the in-kernel k=2 shift never
    # crosses a batch boundary on a valid output row); decoupled from tm.
    Lp_b = _round_up(L_out + 1, 8)
    M_valid = N * Lp_b

    tm, tn, vmem_limit = _choose_tiles(M_valid, Cp, in_bytes, out_bytes, tile_m)
    M = _round_up(M_valid, tm)
    n_mt = M // tm

    # ---- pack input: pairs[t] = [x_pad[2t] ; x_pad[2t+1]] (one fused pass) --
    n_main = 2 * Lp_b                           # rows 0 .. 2*Lp_b-1 of x_pad
    x_main = jnp.pad(x_nlc, ((0, 0), (1, n_main - 1 - L), (0, Cp - C)))
    pairs = x_main.reshape(N * Lp_b, 2 * Cp)    # free, contiguous reshape
    pairs = jnp.pad(pairs, ((0, M - M_valid), (0, 0))).astype(cdt)

    # Per-tile boundary rows: bnd[i] = pairs[(i+1)*tm][:Cp]   (tiny)
    bnd_rows = jnp.concatenate(
        [pairs[tm::tm, :Cp], jnp.zeros((1, Cp), cdt)], axis=0)   # (n_mt, Cp)
    bnd = jnp.broadcast_to(bnd_rows[:, None, :], (n_mt, 16, Cp))

    # ---- fold weights: w_t[k, ci, co] = weight[co, ci, k] ----
    w_t = jnp.transpose(weight, (2, 1, 0))                       # (3, C, C)
    w_t = jnp.pad(w_t, ((0, 0), (0, Cp - C), (0, Cp - C)))       # (3, Cp, Cp)
    w01 = w_t[:2].reshape(2 * Cp, Cp).astype(cdt)
    w2 = w_t[2].astype(cdt)
    b_pad = jnp.pad(bias, (0, Cp - C)).reshape(1, Cp).astype(jnp.float32)

    # ---- hot path: tiled matmuls + bias in Pallas ----
    out_flat = pl.pallas_call(
        _down_conv_kernel,
        out_shape=jax.ShapeDtypeStruct((M, Cp), out_dtype),
        grid_spec=pltpu.PrefetchScalarGridSpec(
            num_scalar_prefetch=0,
            grid=(n_mt, Cp // tn),
            in_specs=[
                pl.BlockSpec((tm, 2 * Cp), lambda i, j: (i, 0)),
                pl.BlockSpec((1, 16, Cp), lambda i, j: (i, 0, 0)),
                pl.BlockSpec((2 * Cp, tn), lambda i, j: (0, j)),
                pl.BlockSpec((Cp, tn), lambda i, j: (0, j)),
                pl.BlockSpec((1, tn), lambda i, j: (0, j)),
            ],
            out_specs=pl.BlockSpec((tm, tn), lambda i, j: (i, j)),
            scratch_shapes=[pltpu.VMEM((tm, tn), jnp.float32)],
        ),
        compiler_params=pltpu.CompilerParams(
            dimension_semantics=("parallel", "parallel"),
            vmem_limit_bytes=vmem_limit,
        ),
    )(pairs, bnd, w01, w2, b_pad)

    return out_flat[:M_valid].reshape(N, Lp_b, Cp)[:, :L_out, :C]


@functools.partial(jax.jit, static_argnames=("compute_dtype", "tile_m"))
def downsample1d(x_ncl, weight, bias, *, compute_dtype=None, tile_m=1024):
    """Downsample1D(use_conv=True) forward, PyTorch NCL contract.

    x_ncl: (N, C, L) -> (N, C, L_out).
    Callers that already hold NLC activations should use downsample1d_nlc
    directly and skip both layout passes.
    """
    # TODO(synk): use_conv=False (AvgPool1d(2, stride=2)) branch not implemented.
    y = downsample1d_nlc(jnp.transpose(x_ncl, (0, 2, 1)), weight, bias,
                         compute_dtype=compute_dtype, tile_m=tile_m)
    return jnp.transpose(y, (0, 2, 1))


def _reference(x_ncl, weight, bias):
    """Pure-JAX reference identical to nn.Conv1d(C, C, 3, stride=2, padding=1)."""
    out = lax.conv_general_dilated(
        x_ncl, weight,
        window_strides=(2,),
        padding=[(1, 1)],
        dimension_numbers=("NCH", "OIH", "NCH"),
        precision=lax.Precision.HIGHEST,
    )
    return out + bias[None, :, None]


if __name__ == "__main__":
    # Downsample1D(channels=4, use_conv=True); input (batch=2, channels=4, seq=16)
    N, C, L = 2, 4, 16

    key = jax.random.PRNGKey(0)
    kx, kw, kb = jax.random.split(key, 3)

    # nn.Conv1d default-style init: U(-bound, bound), bound = 1/sqrt(C*3)
    bound = 1.0 / float(jnp.sqrt(jnp.array(C * 3, jnp.float32)))
    weight = jax.random.uniform(kw, (C, C, 3), jnp.float32, -bound, bound)
    bias = jax.random.uniform(kb, (C,), jnp.float32, -bound, bound)
    x = jax.random.normal(kx, (N, C, L), jnp.float32)

    ref = jax.block_until_ready(_reference(x, weight, bias))

    # f32 compute path (matches module dtype)
    out_f32 = jax.block_until_ready(downsample1d(x, weight, bias))
    assert out_f32.shape == (N, C, L // 2), out_f32.shape
    assert jnp.allclose(out_f32, ref, atol=5e-3, rtol=5e-3), "f32 mismatch"

    # bf16 compute path (bandwidth-optimized; f32 accumulate + f32 bias add).
    # Note: this rounds the activations/weights to bf16 before the matmul.
    out_bf16 = jax.block_until_ready(
        downsample1d(x, weight, bias, compute_dtype=jnp.bfloat16))
    assert out_bf16.shape == (N, C, L // 2), out_bf16.shape
    assert jnp.allclose(out_bf16, ref, atol=5e-2, rtol=5e-2), "bf16 mismatch"

    print("KERNEL_OK")
</pallas_src>

<mosaic_0001>
module attributes {stable_mosaic.version = 11 : i64} {
  func.func @_down_conv_kernel(%arg0: i32, %arg1: i32, %arg2: memref<32x256xf32, #tpu.memory_space<vmem>>, %arg3: memref<1x16x128xf32, #tpu.memory_space<vmem>>, %arg4: memref<256x128xf32, #tpu.memory_space<vmem>>, %arg5: memref<128x128xf32, #tpu.memory_space<vmem>>, %arg6: memref<1x128xf32, #tpu.memory_space<vmem>>, %arg7: memref<32x128xf32, #tpu.memory_space<vmem>>, %arg8: memref<32x128xf32, #tpu.memory_space<vmem>>) attributes {dimension_semantics = [#tpu.dimension_semantics<parallel>, #tpu.dimension_semantics<parallel>], iteration_bounds = array<i64: 1, 1>, scalar_prefetch = 0 : i64, scratch_operands = 1 : i64, tpu.core_type = #tpu.core_type<tc>, window_params = [{transform_indices = @transform_0, window_bounds = array<i64: 32, 256>}, {transform_indices = @transform_1, window_bounds = array<i64: 1, 16, 128>}, {transform_indices = @transform_2, window_bounds = array<i64: 256, 128>}, {transform_indices = @transform_3, window_bounds = array<i64: 128, 128>}, {transform_indices = @transform_4, window_bounds = array<i64: 1, 128>}, {transform_indices = @transform_5, window_bounds = array<i64: 32, 128>}]} {
    %c0 = arith.constant 0 : index
    %c0_0 = arith.constant 0 : index
    %0 = vector.load %arg2[%c0, %c0_0] : memref<32x256xf32, #tpu.memory_space<vmem>>, vector<32x256xf32>
    %c0_1 = arith.constant 0 : index
    %c0_2 = arith.constant 0 : index
    %c0_3 = arith.constant 0 : index
    %1 = vector.load %arg3[%c0_1, %c0_2, %c0_3] : memref<1x16x128xf32, #tpu.memory_space<vmem>>, vector<1x16x128xf32>
    %2 = vector.extract_strided_slice %1 {offsets = [0, 0, 0], sizes = [1, 1, 128], strides = [1, 1, 1]} : vector<1x16x128xf32> to vector<1x1x128xf32>
    %3 = vector.shape_cast %2 : vector<1x1x128xf32> to vector<1x128xf32>
    %4 = vector.extract_strided_slice %0 {offsets = [1, 0], sizes = [31, 128], strides = [1, 1]} : vector<32x256xf32> to vector<31x128xf32>
    %5 = tpu.concatenate %4, %3 in 0 : vector<31x128xf32>, vector<1x128xf32> -> vector<32x128xf32>
    %c0_4 = arith.constant 0 : index
    %c0_5 = arith.constant 0 : index
    %6 = vector.load %arg4[%c0_4, %c0_5] : memref<256x128xf32, #tpu.memory_space<vmem>>, vector<256x128xf32>
    %cst = arith.constant dense<0.000000e+00> : vector<32x128xf32>
    %7 = tpu.matmul %0, %6, %cst {dimension_numbers = #tpu.dot_dimension_numbers<[1], [0], [0], [1], [0, 0, 1, 1], [], []>} : vector<32x256xf32>, vector<256x128xf32>, vector<32x128xf32> -> vector<32x128xf32>
    %c0_6 = arith.constant 0 : index
    %c0_7 = arith.constant 0 : index
    %8 = vector.load %arg8[%c0_6, %c0_7] : memref<32x128xf32, #tpu.memory_space<vmem>>, vector<32x128xf32>
    tpu.vector_store %arg8[%c0_6, %c0_7], %7 {strides = array<i32>} : memref<32x128xf32, #tpu.memory_space<vmem>>, vector<32x128xf32>,
    %c0_8 = arith.constant 0 : index
    %c0_9 = arith.constant 0 : index
    %9 = vector.load %arg8[%c0_8, %c0_9] : memref<32x128xf32, #tpu.memory_space<vmem>>, vector<32x128xf32>
    %c0_10 = arith.constant 0 : index
    %c0_11 = arith.constant 0 : index
    %10 = vector.load %arg5[%c0_10, %c0_11] : memref<128x128xf32, #tpu.memory_space<vmem>>, vector<128x128xf32>
    %cst_12 = arith.constant dense<0.000000e+00> : vector<32x128xf32>
    %11 = tpu.matmul %5, %10, %cst_12 {dimension_numbers = #tpu.dot_dimension_numbers<[1], [0], [0], [1], [0, 0, 1, 1], [], []>} : vector<32x128xf32>, vector<128x128xf32>, vector<32x128xf32> -> vector<32x128xf32>
    %12 = arith.addf %9, %11 : vector<32x128xf32>
    %c0_13 = arith.constant 0 : index
    %c0_14 = arith.constant 0 : index
    %13 = vector.load %arg8[%c0_13, %c0_14] : memref<32x128xf32, #tpu.memory_space<vmem>>, vector<32x128xf32>
    tpu.vector_store %arg8[%c0_13, %c0_14], %12 {strides = array<i32>} : memref<32x128xf32, #tpu.memory_space<vmem>>, vector<32x128xf32>,
    %c0_15 = arith.constant 0 : index
    %c0_16 = arith.constant 0 : index
    %14 = vector.load %arg8[%c0_15, %c0_16] : memref<32x128xf32, #tpu.memory_space<vmem>>, vector<32x128xf32>
    %c0_17 = arith.constant 0 : index
    %c0_18 = arith.constant 0 : index
    %15 = vector.load %arg6[%c0_17, %c0_18] : memref<1x128xf32, #tpu.memory_space<vmem>>, vector<1x128xf32>
    %16 = vector.broadcast %15 : vector<1x128xf32> to vector<32x128xf32>
    %17 = arith.addf %14, %16 : vector<32x128xf32>
    %c0_19 = arith.constant 0 : index
    %c0_20 = arith.constant 0 : index
    %18 = vector.load %arg7[%c0_19, %c0_20] : memref<32x128xf32, #tpu.memory_space<vmem>>, vector<32x128xf32>
    tpu.vector_store %arg7[%c0_19, %c0_20], %17 {strides = array<i32>} : memref<32x128xf32, #tpu.memory_space<vmem>>, vector<32x128xf32>,
    return
  }
  func.func @transform_0(%arg0: i32, %arg1: i32) -> (i32, i32) {
    %c0_i32 = arith.constant 0 : i32
    %c0_i32_0 = arith.constant 0 : i32
    return %arg0, %c0_i32 : i32, i32
  }
  func.func @transform_1(%arg0: i32, %arg1: i32) -> (i32, i32, i32) {
    %c0_i32 = arith.constant 0 : i32
    %c0_i32_0 = arith.constant 0 : i32
    %c0_i32_1 = arith.constant 0 : i32
    return %arg0, %c0_i32, %c0_i32_0 : i32, i32, i32
  }
  func.func @transform_2(%arg0: i32, %arg1: i32) -> (i32, i32) {
    %c0_i32 = arith.constant 0 : i32
    %c0_i32_0 = arith.constant 0 : i32
    return %c0_i32, %arg1 : i32, i32
  }
  func.func @transform_3(%arg0: i32, %arg1: i32) -> (i32, i32) {
    %c0_i32 = arith.constant 0 : i32
    %c0_i32_0 = arith.constant 0 : i32
    return %c0_i32, %arg1 : i32, i32
  }
  func.func @transform_4(%arg0: i32, %arg1: i32) -> (i32, i32) {
    %c0_i32 = arith.constant 0 : i32
    %c0_i32_0 = arith.constant 0 : i32
    return %c0_i32, %arg1 : i32, i32
  }
  func.func @transform_5(%arg0: i32, %arg1: i32) -> (i32, i32) {
    %c0_i32 = arith.constant 0 : i32
    return %arg0, %arg1 : i32, i32
  }
}

</mosaic_0001>

<llo_original>
// kernel: downsample1d_nlc.1
$region0: #{downsample1d_nlc.1}
  #allocation0 [shape = 'u32[]', space=smem, size = 0x4, offset = 0x4, fixed_abs, tag = 'smem constant byte address 0x4 - core index']
  #allocation1 [shape = 'u32[72,128]{1,0:T(1,128)}', space=vmem, size = 0x9000, scoped, tag = 'internal scratch']
  #allocation2 [shape = 'f32[32,128]{1,0:T(8,128)}', space=vmem, size = 0x4000, scoped, tag = 'scratch operand']
  %s0 = inlined_call_operand.vmem [shape: f32[32,256], index: 0, kind: input, shape index: {}]
  %s1 = inlined_call_operand.vmem [shape: f32[1,16,128], index: 1, kind: input, shape index: {}]
  %s2 = inlined_call_operand.vmem [shape: f32[256,128], index: 2, kind: input, shape index: {}]
  %s3 = inlined_call_operand.vmem [shape: f32[128,128], index: 3, kind: input, shape index: {}]
  %s4 = inlined_call_operand.vmem [shape: f32[1,128], index: 4, kind: input, shape index: {}]
  %s5 = inlined_call_operand.vmem [shape: f32[32,128], index: 5, kind: output, shape index: {}]
  %s6 = sld [smem:[#allocation0]]
  $region30: #{downsample1d_nlc.1} parent=0
    _
  %s8 = ssub.s32 1, %s6
  %s9 = scalar_select 0, %s8, %s6
  // Predicated region
  $region2: #{downsample1d_nlc.1} parent=0 // pred_check
    _
  $region3: #{downsample1d_nlc.1} parent=0 // pred_check_branch
    %11 = sbr.rel (0) target = $region5
  $region4: #{downsample1d_nlc.1} parent=0 // pred_region
    _
  $region5: #{downsample1d_nlc.1} parent=0 // pred_fallthru
    _
  // Predicated region
  $region6: #{downsample1d_nlc.1} parent=0 // pred_check
    _
  $region7: #{downsample1d_nlc.1} parent=0 // pred_check_branch
    %13 = sbr.rel (0) target = $region9
  $region8: #{downsample1d_nlc.1} parent=0 // pred_region
    _
  $region9: #{downsample1d_nlc.1} parent=0 // pred_fallthru
    _
  // Predicated region
  $region10: #{downsample1d_nlc.1} parent=0 // pred_check
    _
  $region11: #{downsample1d_nlc.1} parent=0 // pred_check_branch
    %15 = sbr.rel (0) target = $region13
  $region12: #{downsample1d_nlc.1} parent=0 // pred_region
    _
  $region13: #{downsample1d_nlc.1} parent=0 // pred_fallthru
    _
  // Predicated region
  $region14: #{downsample1d_nlc.1} parent=0 // pred_check
    _
  $region15: #{downsample1d_nlc.1} parent=0 // pred_check_branch
    %17 = sbr.rel (0) target = $region17
  $region16: #{downsample1d_nlc.1} parent=0 // pred_region
    _
  $region17: #{downsample1d_nlc.1} parent=0 // pred_fallthru
    _
  // Predicated region
  $region18: #{downsample1d_nlc.1} parent=0 // pred_check
    _
  $region19: #{downsample1d_nlc.1} parent=0 // pred_check_branch
    %19 = sbr.rel (0) target = $region21
  $region20: #{downsample1d_nlc.1} parent=0 // pred_region
    _
  $region21: #{downsample1d_nlc.1} parent=0 // pred_fallthru
    _
  %v20 = vld [vmem:[%s0] sm:$0xff]
  %v21 = vld [vmem:[%s0 + $0x8] sm:$0xff]
  %v22 = vld [vmem:[%s0 + $0x10] sm:$0xff]
  %v23 = vld [vmem:[%s0 + $0x18] sm:$0xff]
  %v24 = vld [vmem:[%s0 + $0x20] sm:$0xff]
  %v25 = vld [vmem:[%s0 + $0x28] sm:$0xff]
  %v26 = vld [vmem:[%s0 + $0x30] sm:$0xff]
  %v27 = vld [vmem:[%s0 + $0x38] sm:$0xff]
  %v28 = vld [vmem:[%s1] sm:$0xff]
  %vm33 = vcmask 1046528
  %v34 = vrot.slane %v20, 1
  %v35 = vrot.slane %v22, 1
  %v36 = vsel %vm33, %v34, %v35
  %v37 = vrot.slane %v24, 1
  %v38 = vsel %vm33, %v35, %v37
  %v39 = vrot.slane %v26, 1
  %v40 = vsel %vm33, %v37, %v39
  %v46 = vrot.slane %v28, 1
  %v48 = vsel %vm33, %v39, %v46
  %v49 = vld [vmem:[%s2] sm:$0xff]
  %v50 = vld [vmem:[%s2 + $0x8] sm:$0xff]
  %v51 = vld [vmem:[%s2 + $0x10] sm:$0xff]
  %v52 = vld [vmem:[%s2 + $0x18] sm:$0xff]
  %v53 = vld [vmem:[%s2 + $0x20] sm:$0xff]
  %v54 = vld [vmem:[%s2 + $0x28] sm:$0xff]
  %v55 = vld [vmem:[%s2 + $0x30] sm:$0xff]
  %v56 = vld [vmem:[%s2 + $0x38] sm:$0xff]
  %v57 = vld [vmem:[%s2 + $0x40] sm:$0xff]
  %v58 = vld [vmem:[%s2 + $0x48] sm:$0xff]
  %v59 = vld [vmem:[%s2 + $0x50] sm:$0xff]
  %v60 = vld [vmem:[%s2 + $0x58] sm:$0xff]
  %v61 = vld [vmem:[%s2 + $0x60] sm:$0xff]
  %v62 = vld [vmem:[%s2 + $0x68] sm:$0xff]
  %v63 = vld [vmem:[%s2 + $0x70] sm:$0xff]
  %v64 = vld [vmem:[%s2 + $0x78] sm:$0xff]
  %v65 = vld [vmem:[%s2 + $0x80] sm:$0xff]
  %v66 = vld [vmem:[%s2 + $0x88] sm:$0xff]
  %v67 = vld [vmem:[%s2 + $0x90] sm:$0xff]
  %v68 = vld [vmem:[%s2 + $0x98] sm:$0xff]
  %v69 = vld [vmem:[%s2 + $0xa0] sm:$0xff]
  %v70 = vld [vmem:[%s2 + $0xa8] sm:$0xff]
  %v71 = vld [vmem:[%s2 + $0xb0] sm:$0xff]
  %v72 = vld [vmem:[%s2 + $0xb8] sm:$0xff]
  %v73 = vld [vmem:[%s2 + $0xc0] sm:$0xff]
  %v74 = vld [vmem:[%s2 + $0xc8] sm:$0xff]
  %v75 = vld [vmem:[%s2 + $0xd0] sm:$0xff]
  %v76 = vld [vmem:[%s2 + $0xd8] sm:$0xff]
  %v77 = vld [vmem:[%s2 + $0xe0] sm:$0xff]
  %v78 = vld [vmem:[%s2 + $0xe8] sm:$0xff]
  %v79 = vld [vmem:[%s2 + $0xf0] sm:$0xff]
  %v80 = vld [vmem:[%s2 + $0xf8] sm:$0xff]
  %81 = vmatpush.msra.mxu0 %v64
  %82 = vmatpush.msra.mxu0 %v63
  %83 = vmatpush.msra.mxu0 %v62
  %84 = vmatpush.msra.mxu0 %v61
  %85 = vmatpush.msra.mxu0 %v60
  %86 = vmatpush.msra.mxu0 %v59
  %87 = vmatpush.msra.mxu0 %v58
  %88 = vmatpush.msra.mxu0 %v57
  %89 = vmatpush.msra.mxu0 %v56
  %90 = vmatpush.msra.mxu0 %v55
  %91 = vmatpush.msra.mxu0 %v54
  %92 = vmatpush.msra.mxu0 %v53
  %93 = vmatpush.msra.mxu0 %v52
  %94 = vmatpush.msra.mxu0 %v51
  %95 = vmatpush.msra.mxu0 %v50
  %96 = vmatpush.msra.mxu0 %v49
  %97 = vmatmul.f32.gmra.mxu0 %v20
  %v98 = vpop.f32.mrf.mxu0
  %v99 = vadd.f32 0.0, %v98
  %100 = vmatmul.f32.gmra.mxu0 %v22
  %v101 = vpop.f32.mrf.mxu0
  %v102 = vadd.f32 0.0, %v101
  %103 = vmatmul.f32.gmra.mxu0 %v24
  %v104 = vpop.f32.mrf.mxu0
  %v105 = vadd.f32 0.0, %v104
  %106 = vmatmul.f32.gmra.mxu0 %v26
  %v107 = vpop.f32.mrf.mxu0
  %v108 = vadd.f32 0.0, %v107
  %109 = vdwg.mxu0
  %110 = vmatpush.msra.mxu0 %v80
  %111 = vmatpush.msra.mxu0 %v79
  %112 = vmatpush.msra.mxu0 %v78
  %113 = vmatpush.msra.mxu0 %v77
  %114 = vmatpush.msra.mxu0 %v76
  %115 = vmatpush.msra.mxu0 %v75
  %116 = vmatpush.msra.mxu0 %v74
  %117 = vmatpush.msra.mxu0 %v73
  %118 = vmatpush.msra.mxu0 %v72
  %119 = vmatpush.msra.mxu0 %v71
  %120 = vmatpush.msra.mxu0 %v70
  %121 = vmatpush.msra.mxu0 %v69
  %122 = vmatpush.msra.mxu0 %v68
  %123 = vmatpush.msra.mxu0 %v67
  %124 = vmatpush.msra.mxu0 %v66
  %125 = vmatpush.msra.mxu0 %v65
  %126 = vmatmul.f32.gmra.mxu0 %v21
  %v127 = vpop.f32.mrf.mxu0
  %v128 = vadd.f32 %v99, %v127
  %129 = vmatmul.f32.gmra.mxu0 %v23
  %v130 = vpop.f32.mrf.mxu0
  %v131 = vadd.f32 %v102, %v130
  %132 = vmatmul.f32.gmra.mxu0 %v25
  %v133 = vpop.f32.mrf.mxu0
  %v134 = vadd.f32 %v105, %v133
  %135 = vmatmul.f32.gmra.mxu0 %v27
  %v136 = vpop.f32.mrf.mxu0
  %v137 = vadd.f32 %v108, %v136
  %138 = vdwg.mxu0
  %139 = vst [vmem:[#allocation2] sm:$0xff] %v128
  %140 = vst [vmem:[#allocation2 + $0x8] sm:$0xff] %v131
  %141 = vst [vmem:[#allocation2 + $0x10] sm:$0xff] %v134
  %142 = vst [vmem:[#allocation2 + $0x18] sm:$0xff] %v137
  %v143 = vld [vmem:[#allocation2] sm:$0xff]
  %v144 = vld [vmem:[#allocation2 + $0x8] sm:$0xff]
  %v145 = vld [vmem:[#allocation2 + $0x10] sm:$0xff]
  %v146 = vld [vmem:[#allocation2 + $0x18] sm:$0xff]
  %v147 = vld [vmem:[%s3] sm:$0xff]
  %v148 = vld [vmem:[%s3 + $0x8] sm:$0xff]
  %v149 = vld [vmem:[%s3 + $0x10] sm:$0xff]
  %v150 = vld [vmem:[%s3 + $0x18] sm:$0xff]
  %v151 = vld [vmem:[%s3 + $0x20] sm:$0xff]
  %v152 = vld [vmem:[%s3 + $0x28] sm:$0xff]
  %v153 = vld [vmem:[%s3 + $0x30] sm:$0xff]
  %v154 = vld [vmem:[%s3 + $0x38] sm:$0xff]
  %v155 = vld [vmem:[%s3 + $0x40] sm:$0xff]
  %v156 = vld [vmem:[%s3 + $0x48] sm:$0xff]
  %v157 = vld [vmem:[%s3 + $0x50] sm:$0xff]
  %v158 = vld [vmem:[%s3 + $0x58] sm:$0xff]
  %v159 = vld [vmem:[%s3 + $0x60] sm:$0xff]
  %v160 = vld [vmem:[%s3 + $0x68] sm:$0xff]
  %v161 = vld [vmem:[%s3 + $0x70] sm:$0xff]
  %v162 = vld [vmem:[%s3 + $0x78] sm:$0xff]
  %163 = vmatpush.msra.mxu0 %v162
  %164 = vmatpush.msra.mxu0 %v161
  %165 = vmatpush.msra.mxu0 %v160
  %166 = vmatpush.msra.mxu0 %v159
  %167 = vmatpush.msra.mxu0 %v158
  %168 = vmatpush.msra.mxu0 %v157
  %169 = vmatpush.msra.mxu0 %v156
  %170 = vmatpush.msra.mxu0 %v155
  %171 = vmatpush.msra.mxu0 %v154
  %172 = vmatpush.msra.mxu0 %v153
  %173 = vmatpush.msra.mxu0 %v152
  %174 = vmatpush.msra.mxu0 %v151
  %175 = vmatpush.msra.mxu0 %v150
  %176 = vmatpush.msra.mxu0 %v149
  %177 = vmatpush.msra.mxu0 %v148
  %178 = vmatpush.msra.mxu0 %v147
  %179 = vmatmul.f32.gmra.mxu0 %v36
  %v180 = vpop.f32.mrf.mxu0
  %v181 = vadd.f32 0.0, %v180
  %182 = vmatmul.f32.gmra.mxu0 %v38
  %v183 = vpop.f32.mrf.mxu0
  %v184 = vadd.f32 0.0, %v183
  %185 = vmatmul.f32.gmra.mxu0 %v40
  %v186 = vpop.f32.mrf.mxu0
  %v187 = vadd.f32 0.0, %v186
  %188 = vmatmul.f32.gmra.mxu0 %v48
  %v189 = vpop.f32.mrf.mxu0
  %v190 = vadd.f32 0.0, %v189
  %191 = vdwg.mxu0
  %v192 = vadd.f32 %v143, %v181
  %v193 = vadd.f32 %v144, %v184
  %v194 = vadd.f32 %v145, %v187
  %v195 = vadd.f32 %v146, %v190
  %196 = vst [vmem:[#allocation2] sm:$0xff] %v192
  %197 = vst [vmem:[#allocation2 + $0x8] sm:$0xff] %v193
  %198 = vst [vmem:[#allocation2 + $0x10] sm:$0xff] %v194
  %199 = vst [vmem:[#allocation2 + $0x18] sm:$0xff] %v195
  %v200 = vld [vmem:[#allocation2] sm:$0xff]
  %v201 = vld [vmem:[#allocation2 + $0x8] sm:$0xff]
  %v202 = vld [vmem:[#allocation2 + $0x10] sm:$0xff]
  %v203 = vld [vmem:[#allocation2 + $0x18] sm:$0xff]
  %v204 = vld [vmem:[%s4] sm:$0x1]
  %v206 = vperm.slane %v204, 0
  %v208 = vadd.f32 %v200, %v206
  %v209 = vadd.f32 %v201, %v206
  %v210 = vadd.f32 %v202, %v206
  %v211 = vadd.f32 %v203, %v206
  %212 = vst [vmem:[%s5] sm:$0xff] %v208
  %213 = vst [vmem:[%s5 + $0x8] sm:$0xff] %v209
  %214 = vst [vmem:[%s5 + $0x10] sm:$0xff] %v210
  %215 = vst [vmem:[%s5 + $0x18] sm:$0xff] %v211
  // Predicated region
  $region22: #{downsample1d_nlc.1} parent=0 // pred_check
    _
  $region23: #{downsample1d_nlc.1} parent=0 // pred_check_branch
    %217 = sbr.rel (0) target = $region25
  $region24: #{downsample1d_nlc.1} parent=0 // pred_region
    _
  $region25: #{downsample1d_nlc.1} parent=0 // pred_fallthru
    _
  // Predicated region
  $region26: #{downsample1d_nlc.1} parent=0 // pred_check
    _
  $region27: #{downsample1d_nlc.1} parent=0 // pred_check_branch
    %219 = sbr.rel (0) target = $region29
  $region28: #{downsample1d_nlc.1} parent=0 // pred_region
    _
  $region29: #{downsample1d_nlc.1} parent=0 // pred_fallthru
    _

</llo_original>
